<compile_context>
chip_gen: v7x
topology: tpu7x:2x2x1
jax: 0.10.0
libtpu: 0.0.40
codegen_flags: <defaults>
</compile_context>

<pallas_src>
import jax
import jax.numpy as jnp
from jax import lax
from jax.experimental import pallas as pl
from jax.experimental.pallas import tpu as pltpu


def _round_up(x: int, m: int) -> int:
    return ((x + m - 1) // m) * m


def toynn_kernel(x_ref, w_ref, b_ref, out_ref, h_ref):
    # x tile: (tb, d_in) in the input dtype; cast to bf16 for the MXU.
    x = x_ref[...].astype(jnp.bfloat16)
    # W: (d_in, d_hid) bf16, constant block index -> VMEM-resident across grid.
    w = w_ref[...]

    # h = X @ W  (bf16 inputs, f32 accumulation on the MXU)
    h = jnp.dot(x, w, preferred_element_type=jnp.float32)          # (tb, d_hid) f32

    # out = h @ W^T, expressed as a contraction over the hidden axis of both
    # operands (flash-attention-style q @ k.T pattern) -> no transposed copy of W.
    out = lax.dot_general(
        h.astype(jnp.bfloat16), w,
        dimension_numbers=(((1,), (1,)), ((), ())),
        preferred_element_type=jnp.float32,
    )                                                              # (tb, d_in) f32

    out = out + b_ref[...]                                         # (1, d_in) broadcast
    out_ref[...] = jnp.maximum(out, 0.0).astype(out_ref.dtype)     # relu
    h_ref[...] = h.astype(h_ref.dtype)


def _vmem_limit_bytes() -> int:
    """Generation-aware VMEM limit: ~100 MiB on v5e/v6e, ~51 MiB fallback (v7x-safe)."""
    phys = None
    try:
        info = pltpu.get_tpu_info()
        phys = getattr(info, "vmem_capacity_bytes", None)
    except Exception:
        phys = None
    if not phys:
        phys = 64 << 20  # conservative: v7x physical VMEM per TensorCore
    return int(min(int(phys) * 0.8, 100 << 20))


def _pick_batch_tile(batch: int, d_in: int, d_hid: int, vmem_limit: int) -> int:
    # Per-row streaming bytes (double-buffered X, out, h tiles, f32).
    row_bytes = 2 * 4 * (d_in + d_in + d_hid)
    # Resident weight (bf16) + bias, pipeline allocates 2 buffers.
    resident = 2 * (2 * d_in * d_hid + 4 * d_in)
    budget = max(vmem_limit - resident - (4 << 20), 8 * row_bytes)
    tb_cap = max(8, min(512, (budget // row_bytes) // 8 * 8))
    # Prefer >= 2 grid points so v7x's two TensorCores both get work.
    tb = min(tb_cap, max(8, _round_up(pl.cdiv(batch, 2), 8)))
    tb = min(tb, _round_up(batch, 8))
    return int(tb)


def toynn_forward(x, w, b):
    """x: (batch, input_dim), w: (input_dim, hidden_dim), b: (input_dim,)."""
    batch, input_dim = x.shape
    w_in, hidden_dim = w.shape
    assert w_in == input_dim and b.shape == (input_dim,)

    vmem_limit = _vmem_limit_bytes()
    tb = _pick_batch_tile(batch, input_dim, hidden_dim, vmem_limit)
    grid = (pl.cdiv(batch, tb),)

    # Weight in bf16 (halves HBM read + VMEM residency); bias as (1, d_in) f32.
    w_bf16 = w.astype(jnp.bfloat16)
    b2d = b.reshape(1, input_dim).astype(jnp.float32)

    flops = 4 * batch * input_dim * hidden_dim  # two matmuls, 2*M*K*N each
    bytes_accessed = (
        x.size * x.dtype.itemsize            # X read
        + w_bf16.size * 2                    # W read (bf16)
        + b2d.size * 4                       # b read
        + batch * input_dim * x.dtype.itemsize   # out write
        + batch * hidden_dim * x.dtype.itemsize  # h write
    )

    out, h = pl.pallas_call(
        toynn_kernel,
        out_shape=(
            jax.ShapeDtypeStruct((batch, input_dim), x.dtype),
            jax.ShapeDtypeStruct((batch, hidden_dim), x.dtype),
        ),
        grid=grid,
        in_specs=[
            # X streams tile-by-tile over the batch axis; feature dim is the
            # full array extent (no padding / no HBM copies).
            pl.BlockSpec((tb, input_dim), lambda i: (i, 0)),
            # W and b: constant block index -> VMEM-resident across the grid.
            pl.BlockSpec((input_dim, hidden_dim), lambda i: (0, 0)),
            pl.BlockSpec((1, input_dim), lambda i: (0, 0)),
        ],
        out_specs=(
            pl.BlockSpec((tb, input_dim), lambda i: (i, 0)),
            pl.BlockSpec((tb, hidden_dim), lambda i: (i, 0)),
        ),
        compiler_params=pltpu.CompilerParams(
            # Batch tiles are independent -> parallel (megacore / v7x dual TC).
            dimension_semantics=("parallel",),
            vmem_limit_bytes=vmem_limit,
        ),
        cost_estimate=pl.CostEstimate(
            flops=flops, transcendentals=0, bytes_accessed=bytes_accessed
        ),
    )(x, w_bf16, b2d)

    return out, h


def init_params(key, input_dim, hidden_dim):
    # xavier_normal_: std = sqrt(2 / (fan_in + fan_out)), zero-mean gaussian.
    std = (2.0 / (input_dim + hidden_dim)) ** 0.5
    w = std * jax.random.normal(key, (input_dim, hidden_dim), dtype=jnp.float32)
    b = jnp.zeros((input_dim,), dtype=jnp.float32)
    return w, b


if __name__ == "__main__":
    batch, input_dim, hidden_dim = 8, 16, 32

    key = jax.random.PRNGKey(0)
    k_x, k_w = jax.random.split(key)

    x = jax.random.normal(k_x, (batch, input_dim), dtype=jnp.float32)
    w, b = init_params(k_w, input_dim, hidden_dim)

    out, h = toynn_forward(x, w, b)
    jax.block_until_ready((out, h))

    # Sanity check against a plain-JAX f32 reference. The kernel runs its
    # matmuls in bf16 (f32 accumulation), so tolerances are loosened.
    h_ref = x @ w
    out_ref = jnp.maximum(h_ref @ w.T + b, 0.0)
    assert out.shape == (batch, input_dim), "out shape mismatch"
    assert h.shape == (batch, hidden_dim), "h shape mismatch"
    assert jnp.allclose(out, out_ref, atol=5e-2, rtol=5e-2), "out mismatch"
    assert jnp.allclose(h, h_ref, atol=5e-2, rtol=5e-2), "h mismatch"

    print("KERNEL_OK")
</pallas_src>

<mosaic_0001>
module attributes {stable_mosaic.version = 11 : i64} {
  func.func @toynn_kernel(%arg0: i32, %arg1: memref<8x16xf32, #tpu.memory_space<vmem>>, %arg2: memref<16x32xbf16, #tpu.memory_space<vmem>>, %arg3: memref<1x16xf32, #tpu.memory_space<vmem>>, %arg4: memref<8x16xf32, #tpu.memory_space<vmem>>, %arg5: memref<8x32xf32, #tpu.memory_space<vmem>>) attributes {dimension_semantics = [#tpu.dimension_semantics<parallel>], iteration_bounds = array<i64: 1>, scalar_prefetch = 0 : i64, scratch_operands = 0 : i64, tpu.core_type = #tpu.core_type<tc>, window_params = [{transform_indices = @transform_0, window_bounds = array<i64: 8, 16>}, {pipeline_mode = #tpu.pipeline_mode<synchronous>, transform_indices = @transform_1, window_bounds = array<i64: 16, 32>}, {pipeline_mode = #tpu.pipeline_mode<synchronous>, transform_indices = @transform_2, window_bounds = array<i64: 1, 16>}, {transform_indices = @transform_3, window_bounds = array<i64: 8, 16>}, {transform_indices = @transform_4, window_bounds = array<i64: 8, 32>}]} {
    %c0 = arith.constant 0 : index
    %c0_0 = arith.constant 0 : index
    %0 = vector.load %arg1[%c0, %c0_0] : memref<8x16xf32, #tpu.memory_space<vmem>>, vector<8x16xf32>
    %1 = arith.truncf %0 : vector<8x16xf32> to vector<8x16xbf16>
    %c0_1 = arith.constant 0 : index
    %c0_2 = arith.constant 0 : index
    %2 = vector.load %arg2[%c0_1, %c0_2] : memref<16x32xbf16, #tpu.memory_space<vmem>>, vector<16x32xbf16>
    %cst = arith.constant dense<0.000000e+00> : vector<8x32xf32>
    %3 = tpu.matmul %1, %2, %cst {dimension_numbers = #tpu.dot_dimension_numbers<[1], [0], [0], [1], [0, 0, 1, 1], [], []>} : vector<8x16xbf16>, vector<16x32xbf16>, vector<8x32xf32> -> vector<8x32xf32>
    %4 = arith.truncf %3 : vector<8x32xf32> to vector<8x32xbf16>
    %cst_3 = arith.constant dense<0.000000e+00> : vector<8x16xf32>
    %5 = tpu.matmul %4, %2, %cst_3 {dimension_numbers = #tpu.dot_dimension_numbers<[1], [1], [0], [0], [0, 0, 1, 0], [], []>} : vector<8x32xbf16>, vector<16x32xbf16>, vector<8x16xf32> -> vector<8x16xf32>
    %c0_4 = arith.constant 0 : index
    %c0_5 = arith.constant 0 : index
    %6 = vector.load %arg3[%c0_4, %c0_5] : memref<1x16xf32, #tpu.memory_space<vmem>>, vector<1x16xf32>
    %7 = vector.broadcast %6 : vector<1x16xf32> to vector<8x16xf32>
    %8 = arith.addf %5, %7 : vector<8x16xf32>
    %cst_6 = arith.constant 0.000000e+00 : f32
    %9 = vector.broadcast %cst_6 : f32 to vector<8x16xf32>
    %10 = arith.maximumf %8, %9 : vector<8x16xf32>
    %c0_7 = arith.constant 0 : index
    %c0_8 = arith.constant 0 : index
    %11 = vector.load %arg4[%c0_7, %c0_8] : memref<8x16xf32, #tpu.memory_space<vmem>>, vector<8x16xf32>
    tpu.vector_store %arg4[%c0_7, %c0_8], %10 {strides = array<i32>} : memref<8x16xf32, #tpu.memory_space<vmem>>, vector<8x16xf32>,
    %c0_9 = arith.constant 0 : index
    %c0_10 = arith.constant 0 : index
    %12 = vector.load %arg5[%c0_9, %c0_10] : memref<8x32xf32, #tpu.memory_space<vmem>>, vector<8x32xf32>
    tpu.vector_store %arg5[%c0_9, %c0_10], %3 {strides = array<i32>} : memref<8x32xf32, #tpu.memory_space<vmem>>, vector<8x32xf32>,
    return
  }
  func.func @transform_0(%arg0: i32) -> (i32, i32) {
    %c0_i32 = arith.constant 0 : i32
    %c0_i32_0 = arith.constant 0 : i32
    return %arg0, %c0_i32 : i32, i32
  }
  func.func @transform_1(%arg0: i32) -> (i32, i32) {
    %c0_i32 = arith.constant 0 : i32
    %c0_i32_0 = arith.constant 0 : i32
    %c0_i32_1 = arith.constant 0 : i32
    return %c0_i32, %c0_i32_0 : i32, i32
  }
  func.func @transform_2(%arg0: i32) -> (i32, i32) {
    %c0_i32 = arith.constant 0 : i32
    %c0_i32_0 = arith.constant 0 : i32
    %c0_i32_1 = arith.constant 0 : i32
    return %c0_i32, %c0_i32_0 : i32, i32
  }
  func.func @transform_3(%arg0: i32) -> (i32, i32) {
    %c0_i32 = arith.constant 0 : i32
    %c0_i32_0 = arith.constant 0 : i32
    return %arg0, %c0_i32 : i32, i32
  }
  func.func @transform_4(%arg0: i32) -> (i32, i32) {
    %c0_i32 = arith.constant 0 : i32
    %c0_i32_0 = arith.constant 0 : i32
    return %arg0, %c0_i32 : i32, i32
  }
}

</mosaic_0001>

<llo_original>
// kernel: tpu_custom_call.1
$region0: #{tpu_custom_call.1}
  #allocation0 [shape = 'u32[]', space=smem, size = 0x4, offset = 0x4, fixed_abs, tag = 'smem constant byte address 0x4 - core index']
  #allocation1 [shape = 'u32[144,128]{1,0:T(1,128)}', space=vmem, size = 0x12000, scoped, tag = 'internal scratch']
  %s0 = inlined_call_operand.hbm [shape: f32[8,16], index: 0, kind: input, shape index: {}]
  %s1 = inlined_call_operand.hbm [shape: bf16[16,32], index: 1, kind: input, shape index: {}]
  %s2 = inlined_call_operand.vmem [shape: f32[1,16], index: 2, kind: input, shape index: {}]
  %s3 = inlined_call_operand.hbm [shape: f32[8,16], index: 3, kind: output, shape index: {0}]
  %s4 = inlined_call_operand.hbm [shape: f32[8,32], index: 4, kind: output, shape index: {1}]
  %5 = xla_tuple %s3, %s4
  %s6 = sld [smem:[#allocation0]]
  $region38: #{tpu_custom_call.1} parent=0
    _
  %s8 = ssub.s32 1, %s6
  %s9 = scalar_select 0, %s8, %s6
  $region1: #{tpu_custom_call.1} parent=0
    #allocation2 [shape = 'u8[4096]{0}', space=vmem, size = 0x1000, scoped, tag = 'input window, operand 0, single buffered']
    #allocation3 [shape = 's32[1]{0}', space=sflag, size = 0x4, scoped, tag = 'scoped memory for tpu_custom_call.1']
    #allocation4 [shape = 's32[1]{0}', space=sflag, size = 0x4, scoped, tag = 'scoped memory for tpu_custom_call.1']
    #allocation5 [shape = 'u8[4096]{0}', space=vmem, size = 0x1000, scoped, tag = 'input window, operand 1, single buffered']
    #allocation6 [shape = 's32[1]{0}', space=sflag, size = 0x4, scoped, tag = 'scoped memory for tpu_custom_call.1']
    #allocation7 [shape = 'u8[4096]{0}', space=vmem, size = 0x1000, scoped, tag = 'output window, operand 0, single buffered']
    #allocation8 [shape = 'u8[4096]{0}', space=vmem, size = 0x1000, scoped, tag = 'output window, operand 1, single buffered']
    #allocation9 [shape = 's32[1]{0}', space=sflag, size = 0x4, scoped, tag = 'scoped memory for tpu_custom_call.1']
    %10 = vsyncpa [#allocation3], 0
    %11 = vsyncpa [#allocation6], 0
    %12 = vsyncpa [#allocation4], 0
    %13 = vsyncpa [#allocation9], 0
    // Predicated region
    $region2: #{tpu_custom_call.1} parent=1 // pred_check
      _
    $region3: #{tpu_custom_call.1} parent=1 // pred_check_branch
      %15 = sbr.rel (0) target = $region5
    $region4: #{tpu_custom_call.1} parent=1 // pred_region
      %s17 = ssub.s32 128, 128
      %18 = vsyncadd [#allocation3], %s17
      %s20 = sshll.u32 [#allocation2], 4
      %s21 = int_to_ptr.vmem [resolvable:$true] %s20
      %23 = dma.hbm_to_vmem [thread:$0]  %s0, 128, %s21, [#allocation3]
    $region5: #{tpu_custom_call.1} parent=1 // pred_fallthru
      _
    // Predicated region
    $region6: #{tpu_custom_call.1} parent=1 // pred_check
      _
    $region7: #{tpu_custom_call.1} parent=1 // pred_check_branch
      %25 = sbr.rel (0) target = $region9
    $region8: #{tpu_custom_call.1} parent=1 // pred_region
      %s27 = ssub.s32 128, 128
      %28 = vsyncadd [#allocation6], %s27
      %s29 = sshll.u32 [#allocation5], 4
      %s30 = int_to_ptr.vmem [resolvable:$true] %s29
      %35 = dma.hbm_to_vmem [thread:$0]  %s1, 128, %s30, [#allocation6], 64, 64, 4
    $region9: #{tpu_custom_call.1} parent=1 // pred_fallthru
      _
    // Predicated region
    $region10: #{tpu_custom_call.1} parent=1 // pred_check
      _
    $region11: #{tpu_custom_call.1} parent=1 // pred_check_branch
      %37 = sbr.rel (0) target = $region13
    $region12: #{tpu_custom_call.1} parent=1 // pred_region
      _
    $region13: #{tpu_custom_call.1} parent=1 // pred_fallthru
      _
    // Predicated region
    $region14: #{tpu_custom_call.1} parent=1 // pred_check
      _
    $region15: #{tpu_custom_call.1} parent=1 // pred_check_branch
      %39 = sbr.rel (0) target = $region17
    $region16: #{tpu_custom_call.1} parent=1 // pred_region
      %40 = dma.done [#allocation3], 128
    $region17: #{tpu_custom_call.1} parent=1 // pred_fallthru
      _
    // Predicated region
    $region18: #{tpu_custom_call.1} parent=1 // pred_check
      _
    $region19: #{tpu_custom_call.1} parent=1 // pred_check_branch
      %42 = sbr.rel (0) target = $region21
    $region20: #{tpu_custom_call.1} parent=1 // pred_region
      %43 = dma.done [#allocation6], 128
    $region21: #{tpu_custom_call.1} parent=1 // pred_fallthru
      _
    %v45 = vld [vmem:[#allocation2] sm:$0xff]
    %v46 = vpack.c.bf16 %v45, %v45
    %v47 = vld [vmem:[#allocation5] sm:$0xf]
    %v48 = vld [vmem:[#allocation5 + $0x4] sm:$0xf]
    %v51 = vunpack.c.l.b16 %v47
    %v52 = vunpack.c.l.b16 %v48
    %v53 = vpack.c.b16 %v52, %v51
    %vm55 = vcmask 130048
    %v57 = vsel %vm55, %v46, 0
    %59 = vmatprep.subr.bf16.mxu0 0
    %60 = vmatpush1.bf16.msra.mxu0 %v53
    %61 = vmatprep.subr.bf16.mxu0 0
    %62 = vmatpush1.bf16.msra.mxu0 0
    %63 = vmatprep.subr.bf16.mxu0 0
    %64 = vmatpush1.bf16.msra.mxu0 0
    %65 = vmatprep.subr.bf16.mxu0 0
    %66 = vmatpush1.bf16.msra.mxu0 0
    %67 = vmatprep.subr.bf16.mxu0 0
    %68 = vmatpush1.bf16.msra.mxu0 0
    %69 = vmatprep.subr.bf16.mxu0 0
    %70 = vmatpush1.bf16.msra.mxu0 0
    %71 = vmatprep.subr.bf16.mxu0 0
    %72 = vmatpush1.bf16.msra.mxu0 0
    %73 = vmatprep.subr.bf16.mxu0 0
    %74 = vmatpush1.bf16.msra.mxu0 0
    %75 = vmatprep.subr.bf16.mxu0 0
    %76 = vmatpush1.bf16.msra.mxu0 0
    %77 = vmatprep.subr.bf16.mxu0 0
    %78 = vmatpush1.bf16.msra.mxu0 0
    %79 = vmatprep.subr.bf16.mxu0 0
    %80 = vmatpush1.bf16.msra.mxu0 0
    %81 = vmatprep.subr.bf16.mxu0 0
    %82 = vmatpush1.bf16.msra.mxu0 0
    %83 = vmatprep.subr.bf16.mxu0 0
    %84 = vmatpush1.bf16.msra.mxu0 0
    %85 = vmatprep.subr.bf16.mxu0 0
    %86 = vmatpush1.bf16.msra.mxu0 0
    %87 = vmatprep.subr.bf16.mxu0 0
    %88 = vmatpush1.bf16.msra.mxu0 0
    %89 = vmatprep.subr.bf16.mxu0 0
    %90 = vmatpush1.bf16.msra.mxu0 0
    %91 = vmatprep.mubr.bf16.mxu0 0
    %92 = vmatmul.mubr.bf16.gmra.mrb[0].mxu0 %v57
    %v93 = vpop.f32.mrb[0].mxu0
    %v94 = vadd.f32 0.0, %v93
    %v95 = vpop.f32.mrb[0].mxu0
    %v96 = vpop.f32.mrb[0].mxu0
    %v97 = vpop.f32.mrb[0].mxu0
    %98 = vdwg.mxu0
    %v99 = vpack.c.bf16 %v94, %v94
    %v100 = vld [vmem:[%s2] sm:$0x1]
    %v102 = vlaneseq
    %v103 = vshrl.u32 %v102, 7
    %v104 = vsub.s32 0, %v103
    %v105 = vrot.slane %v100, %v104
    %vm107 = vcmask 261120
    %v109 = vsel %vm107, %v99, 0
    %v112 = vsel %vm107, %v53, 0
    %114 = vmatprep.subr.bf16.mxu0 0
    %115 = vmatpush1.bf16.xpose.msra.mxu0 %v112
    %116 = vmatprep.subr.bf16.mxu0 0
    %117 = vmatpush1.bf16.xpose.msra.mxu0 0
    %118 = vmatprep.subr.bf16.mxu0 0
    %119 = vmatpush1.bf16.xpose.msra.mxu0 0
    %120 = vmatprep.subr.bf16.mxu0 0
    %121 = vmatpush1.bf16.xpose.msra.mxu0 0
    %122 = vmatprep.subr.bf16.mxu0 0
    %123 = vmatpush1.bf16.xpose.msra.mxu0 0
    %124 = vmatprep.subr.bf16.mxu0 0
    %125 = vmatpush1.bf16.xpose.msra.mxu0 0
    %126 = vmatprep.subr.bf16.mxu0 0
    %127 = vmatpush1.bf16.xpose.msra.mxu0 0
    %128 = vmatprep.subr.bf16.mxu0 0
    %129 = vmatpush1.bf16.xpose.msra.mxu0 0
    %130 = vmatprep.subr.bf16.mxu0 0
    %131 = vmatpush1.bf16.xpose.msra.mxu0 0
    %132 = vmatprep.subr.bf16.mxu0 0
    %133 = vmatpush1.bf16.xpose.msra.mxu0 0
    %134 = vmatprep.subr.bf16.mxu0 0
    %135 = vmatpush1.bf16.xpose.msra.mxu0 0
    %136 = vmatprep.subr.bf16.mxu0 0
    %137 = vmatpush1.bf16.xpose.msra.mxu0 0
    %138 = vmatprep.subr.bf16.mxu0 0
    %139 = vmatpush1.bf16.xpose.msra.mxu0 0
    %140 = vmatprep.subr.bf16.mxu0 0
    %141 = vmatpush1.bf16.xpose.msra.mxu0 0
    %142 = vmatprep.subr.bf16.mxu0 0
    %143 = vmatpush1.bf16.xpose.msra.mxu0 0
    %144 = vmatprep.subr.bf16.mxu0 0
    %145 = vmatpush1.bf16.xpose.msra.mxu0 0
    %146 = vmatprep.mubr.bf16.mxu0 0
    %147 = vmatmul.mubr.bf16.gmra.mrb[0].mxu0 %v109
    %v148 = vpop.f32.mrb[0].mxu0
    %v149 = vadd.f32 %v105, %v148
    %v150 = vpop.f32.mrb[0].mxu0
    %v151 = vpop.f32.mrb[0].mxu0
    %v152 = vpop.f32.mrb[0].mxu0
    %153 = vdwg.mxu0
    %v154 = vmax.f32 %v149, 0.0
    %155 = vst.msk [vmem:[#allocation7] sm:$0xff] %vm55, %v154
    %156 = vst.msk [vmem:[#allocation8] sm:$0xff] %vm107, %v94
    // Predicated region
    $region22: #{tpu_custom_call.1} parent=1 // pred_check
      _
    $region23: #{tpu_custom_call.1} parent=1 // pred_check_branch
      %158 = sbr.rel (0) target = $region25
    $region24: #{tpu_custom_call.1} parent=1 // pred_region
      %s160 = ssub.s32 128, 128
      %161 = vsyncadd [#allocation4], %s160
      %s163 = sshll.u32 [#allocation7], 4
      %s164 = int_to_ptr.vmem [resolvable:$true] %s163
      %166 = dma.vmem_to_hbm [thread:$0]  %s164, 128, %s3, [#allocation4]
    $region25: #{tpu_custom_call.1} parent=1 // pred_fallthru
      _
    // Predicated region
    $region26: #{tpu_custom_call.1} parent=1 // pred_check
      _
    $region27: #{tpu_custom_call.1} parent=1 // pred_check_branch
      %168 = sbr.rel (0) target = $region29
    $region28: #{tpu_custom_call.1} parent=1 // pred_region
      %s170 = ssub.s32 128, 128
      %171 = vsyncadd [#allocation9], %s170
      %s173 = sshll.u32 [#allocation8], 4
      %s174 = int_to_ptr.vmem [resolvable:$true] %s173
      %176 = dma.vmem_to_hbm [thread:$0]  %s174, 128, %s4, [#allocation9]
    $region29: #{tpu_custom_call.1} parent=1 // pred_fallthru
      _
    // Predicated region
    $region30: #{tpu_custom_call.1} parent=1 // pred_check
      _
    $region31: #{tpu_custom_call.1} parent=1 // pred_check_branch
      %178 = sbr.rel (0) target = $region33
    $region32: #{tpu_custom_call.1} parent=1 // pred_region
      %179 = dma.done [#allocation4], 128
    $region33: #{tpu_custom_call.1} parent=1 // pred_fallthru
      _
    // Predicated region
    $region34: #{tpu_custom_call.1} parent=1 // pred_check
      _
    $region35: #{tpu_custom_call.1} parent=1 // pred_check_branch
      %181 = sbr.rel (0) target = $region37
    $region36: #{tpu_custom_call.1} parent=1 // pred_region
      %182 = dma.done [#allocation9], 128
    $region37: #{tpu_custom_call.1} parent=1 // pred_fallthru
      _
    %183 = vsyncpa [#allocation3], 1
    %184 = vsyncpa [#allocation6], 1
    %185 = vsyncpa [#allocation4], 1
    %186 = vsyncpa [#allocation9], 1

</llo_original>
